<compile_context>
chip_gen: v7x
topology: tpu7x:2x2x1
jax: 0.10.0
libtpu: 0.0.40
codegen_flags: <defaults>
</compile_context>

<pallas_src>
import jax
import jax.numpy as jnp
from jax.experimental import pallas as pl
from jax.experimental.pallas import tpu as pltpu

_LANE_CHOICES = (1024, 512, 256, 128)   # lane-dense last dims (multiples of 128)
_SMALL_BYTES = 2 * 1024 * 1024          # below this, let XLA fuse a plain square
_VMEM_LIMIT_BYTES = 32 * 1024 * 1024    # explicit scoped-VMEM limit (safe on all gens)


def _square_kernel(x_ref, o_ref):
    x = x_ref[...]
    o_ref[...] = x * x


def _sublane_multiple(dtype) -> int:
    itemsize = jnp.dtype(dtype).itemsize
    if itemsize >= 4:
        return 8
    if itemsize == 2:
        return 16
    return 32


def _tile_budget_bytes() -> int:
    """Per-buffer tile budget; 2 specs x 2 buffers -> 4x this resident in VMEM."""
    try:
        cap = int(pltpu.get_tpu_info().vmem_capacity_bytes)
    except Exception:
        return 4 << 20
    # 128 MiB-VMEM chips (v5e/v6e) -> 6 MiB/buffer; 64 MiB (v7x) -> 4 MiB/buffer.
    return max(2 << 20, min(6 << 20, cap // 16))


def _pick_lanes(n: int):
    """Largest lane width (multiple of 128) that exactly divides n, else None."""
    for lanes in _LANE_CHOICES:
        if n % lanes == 0:
            return lanes
    return None


def _square_pallas_2d(x2d: jax.Array) -> jax.Array:
    """Tiled elementwise square of an (R, L) slab, L a multiple of 128."""
    rows, lanes = x2d.shape
    dtype = x2d.dtype
    itemsize = jnp.dtype(dtype).itemsize
    sub = _sublane_multiple(dtype)

    # Row-block sized to ~per-buffer budget, multiple of the dtype-aware
    # sublane count.  Full-dim block is always legal when rows is small.
    budget = _tile_budget_bytes()
    rows_cap = max(sub, (budget // (lanes * itemsize)) // sub * sub)
    block_rows = rows if rows <= rows_cap else rows_cap
    grid = (pl.cdiv(rows, block_rows),)

    n = rows * lanes
    cost = pl.CostEstimate(
        flops=n, transcendentals=0, bytes_accessed=2 * n * itemsize)

    return pl.pallas_call(
        _square_kernel,
        out_shape=jax.ShapeDtypeStruct((rows, lanes), dtype),
        grid=grid,
        in_specs=[pl.BlockSpec((block_rows, lanes), lambda i: (i, 0))],
        out_specs=pl.BlockSpec((block_rows, lanes), lambda i: (i, 0)),
        input_output_aliases={0: 0},
        cost_estimate=cost,
        compiler_params=pltpu.CompilerParams(
            dimension_semantics=("parallel",),
            vmem_limit_bytes=_VMEM_LIMIT_BYTES),
    )(x2d)


def square_layer(x: jax.Array, *, force_pallas: bool = False) -> jax.Array:
    """Elementwise x**2, matching torch's `x ** 2` (same shape/dtype)."""
    n = x.size
    if n == 0:
        return x

    lanes = _pick_lanes(n)
    nbytes = n * jnp.dtype(x.dtype).itemsize

    # Ragged element count: any pad/slice/concat would add whole extra HBM
    # passes around a memory-bound kernel, so use the fused XLA square.
    if lanes is None:
        return x * x

    # Tiny activations: a standalone kernel is launch overhead + lost fusion.
    if not force_pallas and nbytes < _SMALL_BYTES:
        return x * x

    x2d = x.reshape(-1, lanes)
    return _square_pallas_2d(x2d).reshape(x.shape)


if __name__ == "__main__":
    key = jax.random.PRNGKey(0)
    k1, k2, k3, k4 = jax.random.split(key, 4)

    # 1) SCCNet-style NCHW activation (small): force the Pallas path to
    #    exercise the kernel (default dispatch would fuse via XLA).
    x_small = jax.random.normal(k1, (2, 4, 16, 16), dtype=jnp.float32)
    out_small = square_layer(x_small, force_pallas=True)
    jax.block_until_ready(out_small)
    assert out_small.shape == x_small.shape and out_small.dtype == x_small.dtype
    assert jnp.allclose(out_small, x_small * x_small, atol=1e-6, rtol=1e-6)

    # 2) Large lane-divisible tensor: exercises multi-step grid + double
    #    buffering through the auto-dispatch path (8 MiB > threshold).
    x_big = jax.random.normal(k2, (64, 256, 128), dtype=jnp.float32)
    out_big = square_layer(x_big)
    jax.block_until_ready(out_big)
    assert out_big.shape == x_big.shape and out_big.dtype == x_big.dtype
    assert jnp.allclose(out_big, x_big * x_big, atol=1e-6, rtol=1e-6)

    # 3) Ragged tensor (element count not a multiple of 128): exercises the
    #    no-pad fallback (fused XLA square) and stays exactly correct.
    x_rag = jax.random.normal(k3, (8, 22, 59, 67), dtype=jnp.float32)
    out_rag = square_layer(x_rag)
    jax.block_until_ready(out_rag)
    assert out_rag.shape == x_rag.shape and out_rag.dtype == x_rag.dtype
    assert jnp.allclose(out_rag, x_rag * x_rag, atol=1e-6, rtol=1e-6)

    # 4) bf16 path: exercises the dtype-aware (16-row) sublane handling.
    x_bf16 = jax.random.normal(k4, (4, 22, 16, 16), dtype=jnp.bfloat16)
    out_bf16 = square_layer(x_bf16, force_pallas=True)
    jax.block_until_ready(out_bf16)
    assert out_bf16.shape == x_bf16.shape and out_bf16.dtype == x_bf16.dtype
    assert jnp.allclose(out_bf16, x_bf16 * x_bf16, atol=1e-2, rtol=1e-2)

    print("KERNEL_OK")
</pallas_src>

<mosaic_0001>
module attributes {stable_mosaic.version = 11 : i64} {
  func.func @_square_kernel(%arg0: i32, %arg1: memref<2x1024xf32, #tpu.memory_space<vmem>>, %arg2: memref<2x1024xf32, #tpu.memory_space<vmem>>) attributes {dimension_semantics = [#tpu.dimension_semantics<parallel>], iteration_bounds = array<i64: 1>, scalar_prefetch = 0 : i64, scratch_operands = 0 : i64, tpu.core_type = #tpu.core_type<tc>, window_params = [{transform_indices = @transform_0, window_bounds = array<i64: 2, 1024>}, {transform_indices = @transform_1, window_bounds = array<i64: 2, 1024>}]} {
    %c0 = arith.constant 0 : index
    %c0_0 = arith.constant 0 : index
    %0 = vector.load %arg1[%c0, %c0_0] : memref<2x1024xf32, #tpu.memory_space<vmem>>, vector<2x1024xf32>
    %1 = arith.mulf %0, %0 : vector<2x1024xf32>
    %c0_1 = arith.constant 0 : index
    %c0_2 = arith.constant 0 : index
    %2 = vector.load %arg2[%c0_1, %c0_2] : memref<2x1024xf32, #tpu.memory_space<vmem>>, vector<2x1024xf32>
    tpu.vector_store %arg2[%c0_1, %c0_2], %1 {strides = array<i32>} : memref<2x1024xf32, #tpu.memory_space<vmem>>, vector<2x1024xf32>,
    return
  }
  func.func @transform_0(%arg0: i32) -> (i32, i32) {
    %c0_i32 = arith.constant 0 : i32
    %c0_i32_0 = arith.constant 0 : i32
    return %arg0, %c0_i32 : i32, i32
  }
  func.func @transform_1(%arg0: i32) -> (i32, i32) {
    %c0_i32 = arith.constant 0 : i32
    %c0_i32_0 = arith.constant 0 : i32
    return %arg0, %c0_i32 : i32, i32
  }
}

</mosaic_0001>

<llo_original>
// kernel: tpu_custom_call.1
$region0: #{tpu_custom_call.1}
  #allocation0 [shape = 'u32[]', space=smem, size = 0x4, offset = 0x4, fixed_abs, tag = 'smem constant byte address 0x4 - core index']
  #allocation1 [shape = 'u32[144,128]{1,0:T(1,128)}', space=vmem, size = 0x12000, scoped, tag = 'internal scratch']
  %s0 = inlined_call_operand.hbm [shape: f32[2,1024], index: 0, kind: input, shape index: {}, may-alias: {0,1}]
  %s1 = inlined_call_operand.hbm [shape: f32[2,1024], index: 1, kind: output, shape index: {}, may-alias: {0,1}]
  %s2 = sld [smem:[#allocation0]]
  $region18: #{tpu_custom_call.1} parent=0
    _
  %s4 = ssub.s32 1, %s2
  %s5 = scalar_select 0, %s4, %s2
  $region1: #{tpu_custom_call.1} parent=0
    #allocation2 [shape = 'u8[8192]{0}', space=vmem, size = 0x2000, scoped, tag = 'input window, operand 0, single buffered']
    #allocation3 [shape = 's32[1]{0}', space=sflag, size = 0x4, scoped, tag = 'scoped memory for tpu_custom_call.1']
    #allocation4 [shape = 's32[1]{0}', space=sflag, size = 0x4, scoped, tag = 'scoped memory for tpu_custom_call.1']
    #allocation5 [shape = 'u8[8192]{0}', space=vmem, size = 0x2000, scoped, tag = 'output window, operand 0, single buffered']
    %6 = vsyncpa [#allocation3], 0
    %7 = vsyncpa [#allocation4], 0
    // Predicated region
    $region2: #{tpu_custom_call.1} parent=1 // pred_check
      _
    $region3: #{tpu_custom_call.1} parent=1 // pred_check_branch
      %9 = sbr.rel (0) target = $region5
    $region4: #{tpu_custom_call.1} parent=1 // pred_region
      %s11 = ssub.s32 256, 256
      %12 = vsyncadd [#allocation3], %s11
      %s14 = sshll.u32 [#allocation2], 4
      %s15 = int_to_ptr.vmem [resolvable:$true] %s14
      %17 = dma.hbm_to_vmem [thread:$0]  %s0, 256, %s15, [#allocation3]
    $region5: #{tpu_custom_call.1} parent=1 // pred_fallthru
      _
    // Predicated region
    $region6: #{tpu_custom_call.1} parent=1 // pred_check
      _
    $region7: #{tpu_custom_call.1} parent=1 // pred_check_branch
      %19 = sbr.rel (0) target = $region9
    $region8: #{tpu_custom_call.1} parent=1 // pred_region
      %20 = dma.done [#allocation3], 256
    $region9: #{tpu_custom_call.1} parent=1 // pred_fallthru
      _
    %v21 = vld [vmem:[#allocation2] sm:$0xff]
    %v22 = vld [vmem:[#allocation2 + $0x8] sm:$0xff]
    %v23 = vmul.f32 %v21, %v21
    %v24 = vmul.f32 %v22, %v22
    %25 = vst [vmem:[#allocation5] sm:$0xff] %v23
    %26 = vst [vmem:[#allocation5 + $0x8] sm:$0xff] %v24
    // Predicated region
    $region10: #{tpu_custom_call.1} parent=1 // pred_check
      _
    $region11: #{tpu_custom_call.1} parent=1 // pred_check_branch
      %28 = sbr.rel (0) target = $region13
    $region12: #{tpu_custom_call.1} parent=1 // pred_region
      %s30 = ssub.s32 256, 256
      %31 = vsyncadd [#allocation4], %s30
      %s33 = sshll.u32 [#allocation5], 4
      %s34 = int_to_ptr.vmem [resolvable:$true] %s33
      %36 = dma.vmem_to_hbm [thread:$0]  %s34, 256, %s1, [#allocation4]
    $region13: #{tpu_custom_call.1} parent=1 // pred_fallthru
      _
    // Predicated region
    $region14: #{tpu_custom_call.1} parent=1 // pred_check
      _
    $region15: #{tpu_custom_call.1} parent=1 // pred_check_branch
      %38 = sbr.rel (0) target = $region17
    $region16: #{tpu_custom_call.1} parent=1 // pred_region
      %39 = dma.done [#allocation4], 256
    $region17: #{tpu_custom_call.1} parent=1 // pred_fallthru
      _
    %40 = vsyncpa [#allocation3], 1
    %41 = vsyncpa [#allocation4], 1

</llo_original>
